<compile_context>
chip_gen: v6e
topology: v6e:2x2x1
jax: 0.10.0
libtpu: 0.0.40
codegen_flags: <defaults>
</compile_context>

<pallas_src>
import jax
import jax.numpy as jnp
from jax.experimental import pallas as pl
from jax.experimental.pallas import tpu as pltpu

_MIB = 1024 * 1024
_FUSED_VOCAB_MAX = 512   # one-hot in-kernel gather only pays off for small vocab


def _pad_up(x, m):
    return -(-x // m) * m


def _round_down(x, m):
    return max(m, (x // m) * m)


def _vmem_capacity_bytes():
    try:
        return int(pltpu.get_tpu_info().vmem_capacity_bytes)
    except Exception:
        return 64 * _MIB   # conservative: v7x per-TensorCore VMEM (smallest current gen)


# ---------------------------------------------------------------------------
# Kernels
# ---------------------------------------------------------------------------
def _skipgram_fused_kernel(idx_ref, v_tab_ref, u_tab_ref, o_ref):
    """Fused embedding gather + dot.

    idx_ref:   (bt, 1+L) int32 -- col 0 = center index, cols 1.. = ctx/negatives
    v_tab_ref: (vocab, E)      -- whole V table, VMEM resident (DMA'd once)
    u_tab_ref: (vocab, E)      -- whole U table, VMEM resident (DMA'd once)
    o_ref:     (L, bt)         -- lane-dense, transposed output block
    """
    vocab = v_tab_ref.shape[0]
    num_ctx = o_ref.shape[0]
    lane_iota = jax.lax.broadcasted_iota(jnp.int32, (1, vocab), 1)

    # Gather V[center] rows via a one-hot MXU matmul (robust in-kernel gather:
    # only iota / compare / dot, no dynamic-gather lowering dependence).
    onehot_c = (idx_ref[:, 0:1] == lane_iota).astype(v_tab_ref.dtype)        # (bt, vocab)
    v_rows = jnp.dot(onehot_c, v_tab_ref[...],
                     preferred_element_type=jnp.float32)                     # (bt, E)

    u_tab = u_tab_ref[...]
    cols = []
    for l in range(num_ctx):                       # small static loop over contexts
        onehot_l = (idx_ref[:, l + 1:l + 2] == lane_iota).astype(u_tab.dtype)
        u_l = jnp.dot(onehot_l, u_tab, preferred_element_type=jnp.float32)   # (bt, E)
        cols.append(jnp.sum(u_l * v_rows, axis=-1, keepdims=True))           # (bt, 1)
    pred = jnp.concatenate(cols, axis=-1)                                    # (bt, L)
    o_ref[...] = pred.T.astype(o_ref.dtype)        # XLU transpose -> lane-dense store


def _skipgram_gathered_kernel(v_ref, u_ref, o_ref):
    """Large-vocab fallback: pre-gathered rows, VPU broadcast-multiply + lane reduce."""
    v = v_ref[...]                                  # (bt, E)
    u = u_ref[...]                                  # (bt, L, E)
    pred = jnp.sum(u * v[:, None, :], axis=-1)      # (bt, L), f32 accumulate
    o_ref[...] = pred.T.astype(o_ref.dtype)         # lane-dense (L, bt) store


# ---------------------------------------------------------------------------
# Tiling / VMEM budgeting
# ---------------------------------------------------------------------------
def _choose_fused_tiling(B, L, E, vocab, table_itemsize, vmem_cap, batch_tile=None):
    vpad = _pad_up(vocab, 128)
    epad = _pad_up(E, 128)
    tables = 2 * 2 * vpad * epad * table_itemsize          # 2 tables, double-buffered
    # Per-batch-element VMEM: index block (x2 buffers, lane-padded), out block
    # (x2 buffers), and in-kernel temps.  The static L-loop is unrolled, so
    # budget as if all L one-hots / gathered rows stay live simultaneously.
    idx_elem = 2 * _pad_up(L + 1, 128) * 4
    out_elem = 2 * _pad_up(L, 8) * 4
    tmp_elem = (vpad + L * (vpad + epad) + 2 * epad) * 4
    per_elem = idx_elem + out_elem + tmp_elem
    if batch_tile is None:
        budget = min(32 * _MIB, vmem_cap // 2)
        bt = max(1, (budget - tables) // per_elem)
        if bt >= B:
            # Keep >= 2 grid steps for large B so v7x megacore has work on both TCs.
            bt = _pad_up(-(-B // 2), 128) if B >= 256 else B
        else:
            bt = _round_down(bt, 128)
    else:
        bt = min(batch_tile, B)
    needed = bt * per_elem + tables
    vmem_limit = int(max(32 * _MIB, min(needed + 16 * _MIB, vmem_cap - 8 * _MIB)))
    return int(bt), vmem_limit


def _choose_gathered_tiling(B, L, E, u_itemsize, vmem_cap, batch_tile=None):
    u_elem = _pad_up(L, 8) * _pad_up(E, 128) * u_itemsize   # one u-block row (padded)
    v_elem = _pad_up(E, 128) * 4
    out_elem = _pad_up(L, 8) * 4
    # 2x double-buffering on u/v/out plus one extra u-sized block in case the
    # broadcast-multiply product temp is materialized (conservative).
    per_elem = 3 * u_elem + 2 * (v_elem + out_elem)
    if batch_tile is None:
        budget = min(48 * _MIB, (vmem_cap * 3) // 4) - 4 * _MIB
        bt = max(1, budget // per_elem)
        if bt >= B:
            bt = _pad_up(-(-B // 2), 128) if B >= 256 else B
        else:
            bt = _round_down(bt, 128)
    else:
        bt = min(batch_tile, B)
    needed = bt * per_elem
    vmem_limit = int(max(32 * _MIB, min(needed + 16 * _MIB, vmem_cap - 8 * _MIB)))
    return int(bt), vmem_limit


# ---------------------------------------------------------------------------
# Wrapper
# ---------------------------------------------------------------------------
def skip_gram_pallas(center, contexts_and_negatives, embed_v, embed_u, *,
                     batch_tile=None, fuse_gather=None):
    """pred = bmm(V[center], U[ctx].permute(0,2,1)) -> (B, 1, L) float32.

    center: (B, 1) int; contexts_and_negatives: (B, L) int; embed_v/embed_u:
    (vocab, E) float tables.  If batch_tile is given it should be a multiple of
    128 (or >= B).  fuse_gather=None picks the path automatically from vocab.
    """
    B = center.shape[0]
    L = contexts_and_negatives.shape[1]
    vocab, E = embed_v.shape
    vmem_cap = _vmem_capacity_bytes()

    if fuse_gather is None:
        vpad = _pad_up(vocab, 128)
        epad = _pad_up(E, 128)
        table_vmem = 2 * 2 * vpad * epad * embed_u.dtype.itemsize
        fuse_gather = (vocab <= _FUSED_VOCAB_MAX) and (table_vmem <= 8 * _MIB)

    if fuse_gather:
        # Fused path: indices go to the kernel, tables stay VMEM-resident; the
        # (B, L, E) `u` slab is never materialized in HBM.
        # NOTE: out-of-range indices produce all-zero one-hots -> score 0
        # (torch nn.Embedding would raise).
        bt, vmem_limit = _choose_fused_tiling(
            B, L, E, vocab, embed_u.dtype.itemsize, vmem_cap, batch_tile)
        idx = jnp.concatenate(
            [center.reshape(B, 1).astype(jnp.int32),
             contexts_and_negatives.astype(jnp.int32)], axis=1)              # (B, 1+L)
        out_t = pl.pallas_call(
            _skipgram_fused_kernel,
            out_shape=jax.ShapeDtypeStruct((L, B), jnp.float32),
            grid_spec=pltpu.PrefetchScalarGridSpec(
                num_scalar_prefetch=0,
                grid=(pl.cdiv(B, bt),),
                in_specs=[
                    pl.BlockSpec((bt, L + 1), lambda b: (b, 0)),
                    pl.BlockSpec((vocab, E), lambda b: (0, 0)),  # whole table, DMA'd once
                    pl.BlockSpec((vocab, E), lambda b: (0, 0)),
                ],
                out_specs=pl.BlockSpec((L, bt), lambda b: (0, b)),
            ),
            compiler_params=pltpu.CompilerParams(
                dimension_semantics=("parallel",),
                vmem_limit_bytes=int(vmem_limit),
            ),
        )(idx, embed_v, embed_u)
    else:
        # Large-vocab fallback: gather with XLA, run the batch-tiled VPU dot in Pallas.
        # NOTE: jnp.take clamps out-of-range indices (torch nn.Embedding raises).
        # TODO(synk): replace with a manual per-row DMA gather (memory_space=pl.ANY
        # + scalar-prefetched indices) to avoid the HBM round trip of the u slab.
        v = jnp.take(embed_v, center.reshape(B), axis=0).astype(jnp.float32)       # (B, E)
        u = jnp.take(embed_u, contexts_and_negatives, axis=0).astype(jnp.float32)  # (B, L, E)
        bt, vmem_limit = _choose_gathered_tiling(
            B, L, E, u.dtype.itemsize, vmem_cap, batch_tile)
        out_t = pl.pallas_call(
            _skipgram_gathered_kernel,
            out_shape=jax.ShapeDtypeStruct((L, B), jnp.float32),
            grid_spec=pltpu.PrefetchScalarGridSpec(
                num_scalar_prefetch=0,
                grid=(pl.cdiv(B, bt),),
                in_specs=[
                    pl.BlockSpec((bt, E), lambda b: (b, 0)),
                    pl.BlockSpec((bt, L, E), lambda b: (b, 0, 0)),
                ],
                out_specs=pl.BlockSpec((L, bt), lambda b: (0, b)),
            ),
            compiler_params=pltpu.CompilerParams(
                dimension_semantics=("parallel",),
                vmem_limit_bytes=int(vmem_limit),
            ),
        )(v, u)

    # (L, B) -> (B, 1, L): restore torch.bmm's output shape (tiny, cheap transpose).
    return out_t.T[:, None, :]


class Word2vecPallas:
    """Mirror of BiNE Word2vec(nn.Module): two embedding tables V and U."""

    def __init__(self, vocab_size, embedding_size, key):
        kv, ku = jax.random.split(key)
        # nn.Embedding default init is N(0, 1); deterministic via PRNGKey.
        self.V = jax.random.normal(kv, (vocab_size, embedding_size), jnp.float32)
        self.U = jax.random.normal(ku, (vocab_size, embedding_size), jnp.float32)

    def __call__(self, center, context_negative):
        return skip_gram_pallas(center, context_negative, self.V, self.U)


if __name__ == "__main__":
    key = jax.random.PRNGKey(0)
    k_params, k_c1, k_x1, k_c2, k_x2 = jax.random.split(key, 5)

    vocab_size = 64
    embedding_size = 128          # lane-aligned hidden size
    B, L = 2, 6                   # batch=2, 1 positive + 5 negatives per center

    model = Word2vecPallas(vocab_size, embedding_size, k_params)
    center = jax.random.randint(k_c1, (B, 1), 0, vocab_size, dtype=jnp.int32)
    context_negative = jax.random.randint(k_x1, (B, L), 0, vocab_size, dtype=jnp.int32)

    pred = jax.block_until_ready(model(center, context_negative))

    # Pure-JAX reference of the same forward pass.
    ref = jnp.einsum("bie,ble->bil",
                     jnp.take(model.V, center, axis=0),
                     jnp.take(model.U, context_negative, axis=0))
    assert pred.shape == (B, 1, L), pred.shape
    assert jnp.allclose(pred, ref, atol=1e-4, rtol=1e-4)

    # Fused path with a multi-step grid and a masked partial tail block.
    B2 = 300
    center2 = jax.random.randint(k_c2, (B2, 1), 0, vocab_size, dtype=jnp.int32)
    ctx2 = jax.random.randint(k_x2, (B2, L), 0, vocab_size, dtype=jnp.int32)
    pred2 = jax.block_until_ready(
        skip_gram_pallas(center2, ctx2, model.V, model.U, batch_tile=128))
    ref2 = jnp.einsum("bie,ble->bil",
                      jnp.take(model.V, center2, axis=0),
                      jnp.take(model.U, ctx2, axis=0))
    assert pred2.shape == (B2, 1, L), pred2.shape
    assert jnp.allclose(pred2, ref2, atol=1e-4, rtol=1e-4)

    # Large-vocab fallback path (pre-gathered u), multi-step grid.
    pred3 = jax.block_until_ready(
        skip_gram_pallas(center2, ctx2, model.V, model.U,
                         batch_tile=128, fuse_gather=False))
    assert jnp.allclose(pred3, ref2, atol=1e-4, rtol=1e-4)

    print("KERNEL_OK")
</pallas_src>

<mosaic_0001>
module attributes {stable_mosaic.version = 11 : i64} {
  func.func @_skipgram_fused_kernel(%arg0: i32, %arg1: memref<2x7xi32, #tpu.memory_space<vmem>>, %arg2: memref<64x128xf32, #tpu.memory_space<vmem>>, %arg3: memref<64x128xf32, #tpu.memory_space<vmem>>, %arg4: memref<6x2xf32, #tpu.memory_space<vmem>>) attributes {dimension_semantics = [#tpu.dimension_semantics<parallel>], iteration_bounds = array<i64: 1>, scalar_prefetch = 0 : i64, scratch_operands = 0 : i64, tpu.core_type = #tpu.core_type<tc>, window_params = [{transform_indices = @transform_0, window_bounds = array<i64: 2, 7>}, {pipeline_mode = #tpu.pipeline_mode<synchronous>, transform_indices = @transform_1, window_bounds = array<i64: 64, 128>}, {pipeline_mode = #tpu.pipeline_mode<synchronous>, transform_indices = @transform_2, window_bounds = array<i64: 64, 128>}, {transform_indices = @transform_3, window_bounds = array<i64: 6, 2>}]} {
    %0 = tpu.iota {dimensions = array<i32: 1>} : vector<1x64xi32>
    %c0 = arith.constant 0 : index
    %c0_0 = arith.constant 0 : index
    %1 = vector.load %arg1[%c0, %c0_0] : memref<2x7xi32, #tpu.memory_space<vmem>>, vector<2x1xi32>
    %2 = vector.broadcast %1 : vector<2x1xi32> to vector<2x64xi32>
    %3 = vector.broadcast %0 : vector<1x64xi32> to vector<2x64xi32>
    %4 = arith.cmpi eq, %2, %3 : vector<2x64xi32>
    %5 = arith.extui %4 : vector<2x64xi1> to vector<2x64xi32>
    %6 = arith.sitofp %5 : vector<2x64xi32> to vector<2x64xf32>
    %c0_1 = arith.constant 0 : index
    %c0_2 = arith.constant 0 : index
    %7 = vector.load %arg2[%c0_1, %c0_2] : memref<64x128xf32, #tpu.memory_space<vmem>>, vector<64x128xf32>
    %cst = arith.constant dense<0.000000e+00> : vector<2x128xf32>
    %8 = tpu.matmul %6, %7, %cst {dimension_numbers = #tpu.dot_dimension_numbers<[1], [0], [0], [1], [0, 0, 1, 1], [], []>} : vector<2x64xf32>, vector<64x128xf32>, vector<2x128xf32> -> vector<2x128xf32>
    %c0_3 = arith.constant 0 : index
    %c0_4 = arith.constant 0 : index
    %9 = vector.load %arg3[%c0_3, %c0_4] : memref<64x128xf32, #tpu.memory_space<vmem>>, vector<64x128xf32>
    %c0_5 = arith.constant 0 : index
    %c1 = arith.constant 1 : index
    %10 = vector.load %arg1[%c0_5, %c1] : memref<2x7xi32, #tpu.memory_space<vmem>>, vector<2x1xi32>
    %11 = vector.broadcast %10 : vector<2x1xi32> to vector<2x64xi32>
    %12 = vector.broadcast %0 : vector<1x64xi32> to vector<2x64xi32>
    %13 = arith.cmpi eq, %11, %12 : vector<2x64xi32>
    %14 = arith.extui %13 : vector<2x64xi1> to vector<2x64xi32>
    %15 = arith.sitofp %14 : vector<2x64xi32> to vector<2x64xf32>
    %cst_6 = arith.constant dense<0.000000e+00> : vector<2x128xf32>
    %16 = tpu.matmul %15, %9, %cst_6 {dimension_numbers = #tpu.dot_dimension_numbers<[1], [0], [0], [1], [0, 0, 1, 1], [], []>} : vector<2x64xf32>, vector<64x128xf32>, vector<2x128xf32> -> vector<2x128xf32>
    %17 = arith.mulf %16, %8 : vector<2x128xf32>
    %cst_7 = arith.constant dense<0.000000e+00> : vector<2xf32>
    %18 = vector.multi_reduction <add>, %17, %cst_7 [1] : vector<2x128xf32> to vector<2xf32>
    %19 = vector.shape_cast %18 : vector<2xf32> to vector<2x1xf32>
    %c0_8 = arith.constant 0 : index
    %c2 = arith.constant 2 : index
    %20 = vector.load %arg1[%c0_8, %c2] : memref<2x7xi32, #tpu.memory_space<vmem>>, vector<2x1xi32>
    %21 = vector.broadcast %20 : vector<2x1xi32> to vector<2x64xi32>
    %22 = vector.broadcast %0 : vector<1x64xi32> to vector<2x64xi32>
    %23 = arith.cmpi eq, %21, %22 : vector<2x64xi32>
    %24 = arith.extui %23 : vector<2x64xi1> to vector<2x64xi32>
    %25 = arith.sitofp %24 : vector<2x64xi32> to vector<2x64xf32>
    %cst_9 = arith.constant dense<0.000000e+00> : vector<2x128xf32>
    %26 = tpu.matmul %25, %9, %cst_9 {dimension_numbers = #tpu.dot_dimension_numbers<[1], [0], [0], [1], [0, 0, 1, 1], [], []>} : vector<2x64xf32>, vector<64x128xf32>, vector<2x128xf32> -> vector<2x128xf32>
    %27 = arith.mulf %26, %8 : vector<2x128xf32>
    %cst_10 = arith.constant dense<0.000000e+00> : vector<2xf32>
    %28 = vector.multi_reduction <add>, %27, %cst_10 [1] : vector<2x128xf32> to vector<2xf32>
    %29 = vector.shape_cast %28 : vector<2xf32> to vector<2x1xf32>
    %c0_11 = arith.constant 0 : index
    %c3 = arith.constant 3 : index
    %30 = vector.load %arg1[%c0_11, %c3] : memref<2x7xi32, #tpu.memory_space<vmem>>, vector<2x1xi32>
    %31 = vector.broadcast %30 : vector<2x1xi32> to vector<2x64xi32>
    %32 = vector.broadcast %0 : vector<1x64xi32> to vector<2x64xi32>
    %33 = arith.cmpi eq, %31, %32 : vector<2x64xi32>
    %34 = arith.extui %33 : vector<2x64xi1> to vector<2x64xi32>
    %35 = arith.sitofp %34 : vector<2x64xi32> to vector<2x64xf32>
    %cst_12 = arith.constant dense<0.000000e+00> : vector<2x128xf32>
    %36 = tpu.matmul %35, %9, %cst_12 {dimension_numbers = #tpu.dot_dimension_numbers<[1], [0], [0], [1], [0, 0, 1, 1], [], []>} : vector<2x64xf32>, vector<64x128xf32>, vector<2x128xf32> -> vector<2x128xf32>
    %37 = arith.mulf %36, %8 : vector<2x128xf32>
    %cst_13 = arith.constant dense<0.000000e+00> : vector<2xf32>
    %38 = vector.multi_reduction <add>, %37, %cst_13 [1] : vector<2x128xf32> to vector<2xf32>
    %39 = vector.shape_cast %38 : vector<2xf32> to vector<2x1xf32>
    %c0_14 = arith.constant 0 : index
    %c4 = arith.constant 4 : index
    %40 = vector.load %arg1[%c0_14, %c4] : memref<2x7xi32, #tpu.memory_space<vmem>>, vector<2x1xi32>
    %41 = vector.broadcast %40 : vector<2x1xi32> to vector<2x64xi32>
    %42 = vector.broadcast %0 : vector<1x64xi32> to vector<2x64xi32>
    %43 = arith.cmpi eq, %41, %42 : vector<2x64xi32>
    %44 = arith.extui %43 : vector<2x64xi1> to vector<2x64xi32>
    %45 = arith.sitofp %44 : vector<2x64xi32> to vector<2x64xf32>
    %cst_15 = arith.constant dense<0.000000e+00> : vector<2x128xf32>
    %46 = tpu.matmul %45, %9, %cst_15 {dimension_numbers = #tpu.dot_dimension_numbers<[1], [0], [0], [1], [0, 0, 1, 1], [], []>} : vector<2x64xf32>, vector<64x128xf32>, vector<2x128xf32> -> vector<2x128xf32>
    %47 = arith.mulf %46, %8 : vector<2x128xf32>
    %cst_16 = arith.constant dense<0.000000e+00> : vector<2xf32>
    %48 = vector.multi_reduction <add>, %47, %cst_16 [1] : vector<2x128xf32> to vector<2xf32>
    %49 = vector.shape_cast %48 : vector<2xf32> to vector<2x1xf32>
    %c0_17 = arith.constant 0 : index
    %c5 = arith.constant 5 : index
    %50 = vector.load %arg1[%c0_17, %c5] : memref<2x7xi32, #tpu.memory_space<vmem>>, vector<2x1xi32>
    %51 = vector.broadcast %50 : vector<2x1xi32> to vector<2x64xi32>
    %52 = vector.broadcast %0 : vector<1x64xi32> to vector<2x64xi32>
    %53 = arith.cmpi eq, %51, %52 : vector<2x64xi32>
    %54 = arith.extui %53 : vector<2x64xi1> to vector<2x64xi32>
    %55 = arith.sitofp %54 : vector<2x64xi32> to vector<2x64xf32>
    %cst_18 = arith.constant dense<0.000000e+00> : vector<2x128xf32>
    %56 = tpu.matmul %55, %9, %cst_18 {dimension_numbers = #tpu.dot_dimension_numbers<[1], [0], [0], [1], [0, 0, 1, 1], [], []>} : vector<2x64xf32>, vector<64x128xf32>, vector<2x128xf32> -> vector<2x128xf32>
    %57 = arith.mulf %56, %8 : vector<2x128xf32>
    %cst_19 = arith.constant dense<0.000000e+00> : vector<2xf32>
    %58 = vector.multi_reduction <add>, %57, %cst_19 [1] : vector<2x128xf32> to vector<2xf32>
    %59 = vector.shape_cast %58 : vector<2xf32> to vector<2x1xf32>
    %c0_20 = arith.constant 0 : index
    %c6 = arith.constant 6 : index
    %60 = vector.load %arg1[%c0_20, %c6] : memref<2x7xi32, #tpu.memory_space<vmem>>, vector<2x1xi32>
    %61 = vector.broadcast %60 : vector<2x1xi32> to vector<2x64xi32>
    %62 = vector.broadcast %0 : vector<1x64xi32> to vector<2x64xi32>
    %63 = arith.cmpi eq, %61, %62 : vector<2x64xi32>
    %64 = arith.extui %63 : vector<2x64xi1> to vector<2x64xi32>
    %65 = arith.sitofp %64 : vector<2x64xi32> to vector<2x64xf32>
    %cst_21 = arith.constant dense<0.000000e+00> : vector<2x128xf32>
    %66 = tpu.matmul %65, %9, %cst_21 {dimension_numbers = #tpu.dot_dimension_numbers<[1], [0], [0], [1], [0, 0, 1, 1], [], []>} : vector<2x64xf32>, vector<64x128xf32>, vector<2x128xf32> -> vector<2x128xf32>
    %67 = arith.mulf %66, %8 : vector<2x128xf32>
    %cst_22 = arith.constant dense<0.000000e+00> : vector<2xf32>
    %68 = vector.multi_reduction <add>, %67, %cst_22 [1] : vector<2x128xf32> to vector<2xf32>
    %69 = vector.shape_cast %68 : vector<2xf32> to vector<2x1xf32>
    %70 = tpu.concatenate %19, %29, %39, %49, %59, %69 in 1 : vector<2x1xf32>, vector<2x1xf32>, vector<2x1xf32>, vector<2x1xf32>, vector<2x1xf32>, vector<2x1xf32> -> vector<2x6xf32>
    %71 = tpu.transpose %70, [1, 0] : vector<2x6xf32> -> vector<6x2xf32>
    %c0_23 = arith.constant 0 : index
    %c0_24 = arith.constant 0 : index
    %72 = vector.load %arg4[%c0_23, %c0_24] : memref<6x2xf32, #tpu.memory_space<vmem>>, vector<6x2xf32>
    tpu.vector_store %arg4[%c0_23, %c0_24], %71 {strides = array<i32>} : memref<6x2xf32, #tpu.memory_space<vmem>>, vector<6x2xf32>,
    return
  }
  func.func @transform_0(%arg0: i32) -> (i32, i32) {
    %c0_i32 = arith.constant 0 : i32
    %c0_i32_0 = arith.constant 0 : i32
    return %arg0, %c0_i32 : i32, i32
  }
  func.func @transform_1(%arg0: i32) -> (i32, i32) {
    %c0_i32 = arith.constant 0 : i32
    %c0_i32_0 = arith.constant 0 : i32
    %c0_i32_1 = arith.constant 0 : i32
    return %c0_i32, %c0_i32_0 : i32, i32
  }
  func.func @transform_2(%arg0: i32) -> (i32, i32) {
    %c0_i32 = arith.constant 0 : i32
    %c0_i32_0 = arith.constant 0 : i32
    %c0_i32_1 = arith.constant 0 : i32
    return %c0_i32, %c0_i32_0 : i32, i32
  }
  func.func @transform_3(%arg0: i32) -> (i32, i32) {
    %c0_i32 = arith.constant 0 : i32
    %c0_i32_0 = arith.constant 0 : i32
    return %c0_i32, %arg0 : i32, i32
  }
}

</mosaic_0001>

<llo_original>
// kernel: tpu_custom_call.1
$region0: #{tpu_custom_call.1}
  #allocation0 [shape = 'u32[]', space=smem, size = 0x4, offset = 0x4, fixed_abs, tag = 'smem constant byte address 0x4 - core index']
  #allocation1 [shape = 'u32[144,128]{1,0:T(1,128)}', space=vmem, size = 0x12000, scoped, tag = 'internal scratch']
  %s0 = inlined_call_operand.hbm [shape: s32[2,7], index: 0, kind: input, shape index: {}]
  %s1 = inlined_call_operand.hbm [shape: f32[64,128], index: 1, kind: input, shape index: {}]
  %s2 = inlined_call_operand.hbm [shape: f32[64,128], index: 2, kind: input, shape index: {}]
  %s3 = inlined_call_operand.vmem [shape: f32[6,2], index: 3, kind: output, shape index: {}]
  %s4 = sld [smem:[#allocation0]]
  $region34: #{tpu_custom_call.1} parent=0
    _
  %s6 = ssub.s32 1, %s4
  %s7 = scalar_select 0, %s6, %s4
  $region1: #{tpu_custom_call.1} parent=0
    #allocation2 [shape = 'u8[1024]{0}', space=vmem, size = 0x400, scoped, tag = 'input window, operand 0, single buffered']
    #allocation3 [shape = 's32[1]{0}', space=sflag, size = 0x4, scoped, tag = 'scoped memory for tpu_custom_call.1']
    #allocation4 [shape = 'u8[32768]{0}', space=vmem, size = 0x8000, scoped, tag = 'input window, operand 1, single buffered']
    #allocation5 [shape = 's32[1]{0}', space=sflag, size = 0x4, scoped, tag = 'scoped memory for tpu_custom_call.1']
    #allocation6 [shape = 'u8[32768]{0}', space=vmem, size = 0x8000, scoped, tag = 'input window, operand 2, single buffered']
    %8 = vsyncpa [#allocation3], 0
    %9 = vsyncpa [#allocation5], 0
    // Predicated region
    $region2: #{tpu_custom_call.1} parent=1 // pred_check
      _
    $region3: #{tpu_custom_call.1} parent=1 // pred_check_branch
      %11 = sbr.rel (0) target = $region5
    $region4: #{tpu_custom_call.1} parent=1 // pred_region
      %s13 = ssub.s32 32, 32
      %14 = vsyncadd [#allocation3], %s13
      %s16 = sshll.u32 [#allocation2], 4
      %s17 = int_to_ptr.vmem [resolvable:$true] %s16
      %19 = dma.hbm_to_vmem [thread:$0]  %s0, 32, %s17, [#allocation3]
    $region5: #{tpu_custom_call.1} parent=1 // pred_fallthru
      _
    // Predicated region
    $region6: #{tpu_custom_call.1} parent=1 // pred_check
      _
    $region7: #{tpu_custom_call.1} parent=1 // pred_check_branch
      %21 = sbr.rel (0) target = $region9
    $region8: #{tpu_custom_call.1} parent=1 // pred_region
      %s23 = ssub.s32 1024, 1024
      %24 = vsyncadd [#allocation5], %s23
      %s25 = sshll.u32 [#allocation4], 4
      %s26 = int_to_ptr.vmem [resolvable:$true] %s25
      %31 = dma.hbm_to_vmem [thread:$0]  %s1, 1024, %s26, [#allocation5], 128, 128, 8
    $region9: #{tpu_custom_call.1} parent=1 // pred_fallthru
      _
    // Predicated region
    $region10: #{tpu_custom_call.1} parent=1 // pred_check
      _
    $region11: #{tpu_custom_call.1} parent=1 // pred_check_branch
      %33 = sbr.rel (0) target = $region13
    $region12: #{tpu_custom_call.1} parent=1 // pred_region
      %s35 = ssub.s32 1024, 1024
      %36 = vsyncadd [#allocation5], %s35
      %s37 = sshll.u32 [#allocation6], 4
      %s38 = int_to_ptr.vmem [resolvable:$true] %s37
      %43 = dma.hbm_to_vmem [thread:$0]  %s2, 1024, %s38, [#allocation5], 128, 128, 8
    $region13: #{tpu_custom_call.1} parent=1 // pred_fallthru
      _
    // Predicated region
    $region14: #{tpu_custom_call.1} parent=1 // pred_check
      _
    $region15: #{tpu_custom_call.1} parent=1 // pred_check_branch
      %45 = sbr.rel (0) target = $region17
    $region16: #{tpu_custom_call.1} parent=1 // pred_region
      %46 = dma.done [#allocation3], 32
    $region17: #{tpu_custom_call.1} parent=1 // pred_fallthru
      _
    // Predicated region
    $region18: #{tpu_custom_call.1} parent=1 // pred_check
      _
    $region19: #{tpu_custom_call.1} parent=1 // pred_check_branch
      %48 = sbr.rel (0) target = $region21
    $region20: #{tpu_custom_call.1} parent=1 // pred_region
      %49 = dma.done [#allocation5], 1024
    $region21: #{tpu_custom_call.1} parent=1 // pred_fallthru
      _
    // Predicated region
    $region22: #{tpu_custom_call.1} parent=1 // pred_check
      _
    $region23: #{tpu_custom_call.1} parent=1 // pred_check_branch
      %51 = sbr.rel (0) target = $region25
    $region24: #{tpu_custom_call.1} parent=1 // pred_region
      %52 = dma.done [#allocation5], 1024
    $region25: #{tpu_custom_call.1} parent=1 // pred_fallthru
      _
    %v53 = vlaneseq
    %v54 = vand.u32 %v53, 127
    %v55 = vld [vmem:[#allocation2] sm:$0x3]
    %56 = vset.pattern.permute.xlu0 0
    %57 = vperm.xlu0 %56, %v55
    %v58 = vpop.permute.xlu0 %57
    %vm59 = vcmp.eq.s32.totalorder %v58, %v54
    %v60 = vsel %vm59, 1, 0
    %v61 = vcvt.s32.f32 %v60
    %v62 = vld [vmem:[#allocation4] sm:$0xff]
    %v63 = vld [vmem:[#allocation4 + $0x8] sm:$0xff]
    %v64 = vld [vmem:[#allocation4 + $0x10] sm:$0xff]
    %v65 = vld [vmem:[#allocation4 + $0x18] sm:$0xff]
    %v66 = vld [vmem:[#allocation4 + $0x20] sm:$0xff]
    %v67 = vld [vmem:[#allocation4 + $0x28] sm:$0xff]
    %v68 = vld [vmem:[#allocation4 + $0x30] sm:$0xff]
    %v69 = vld [vmem:[#allocation4 + $0x38] sm:$0xff]
    %vm70 = vcmask 523264
    %v72 = vsel %vm70, %v61, 0
    %74 = vmatprep.subr.mxu0 0.0
    %75 = vmatpush1.msra.mxu0 0.0
    %76 = vmatprep.subr.mxu0 0.0
    %77 = vmatpush1.msra.mxu0 0.0
    %78 = vmatprep.subr.mxu0 0.0
    %79 = vmatpush1.msra.mxu0 0.0
    %80 = vmatprep.subr.mxu0 0.0
    %81 = vmatpush1.msra.mxu0 0.0
    %82 = vmatprep.subr.mxu0 0.0
    %83 = vmatpush1.msra.mxu0 0.0
    %84 = vmatprep.subr.mxu0 0.0
    %85 = vmatpush1.msra.mxu0 0.0
    %86 = vmatprep.subr.mxu0 0.0
    %87 = vmatpush1.msra.mxu0 0.0
    %88 = vmatprep.subr.mxu0 0.0
    %89 = vmatpush1.msra.mxu0 0.0
    %90 = vmatprep.subr.mxu0 0.0
    %91 = vmatpush1.msra.mxu0 %v69
    %92 = vmatprep.subr.mxu0 0.0
    %93 = vmatpush1.msra.mxu0 %v68
    %94 = vmatprep.subr.mxu0 0.0
    %95 = vmatpush1.msra.mxu0 %v67
    %96 = vmatprep.subr.mxu0 0.0
    %97 = vmatpush1.msra.mxu0 %v66
    %98 = vmatprep.subr.mxu0 0.0
    %99 = vmatpush1.msra.mxu0 %v65
    %100 = vmatprep.subr.mxu0 0.0
    %101 = vmatpush1.msra.mxu0 %v64
    %102 = vmatprep.subr.mxu0 0.0
    %103 = vmatpush1.msra.mxu0 %v63
    %104 = vmatprep.subr.mxu0 0.0
    %105 = vmatpush1.msra.mxu0 %v62
    %106 = vmatprep.subr.mxu0 0.0
    %107 = vmatpush2.msra.mxu0 0.0
    %108 = vmatprep.subr.mxu0 0.0
    %109 = vmatpush2.msra.mxu0 0.0
    %110 = vmatprep.subr.mxu0 0.0
    %111 = vmatpush2.msra.mxu0 0.0
    %112 = vmatprep.subr.mxu0 0.0
    %113 = vmatpush2.msra.mxu0 0.0
    %114 = vmatprep.subr.mxu0 0.0
    %115 = vmatpush2.msra.mxu0 0.0
    %116 = vmatprep.subr.mxu0 0.0
    %117 = vmatpush2.msra.mxu0 0.0
    %118 = vmatprep.subr.mxu0 0.0
    %119 = vmatpush2.msra.mxu0 0.0
    %120 = vmatprep.subr.mxu0 0.0
    %121 = vmatpush2.msra.mxu0 0.0
    %122 = vmatprep.subr.mxu0 0.0
    %123 = vmatpush2.msra.mxu0 0.0
    %124 = vmatprep.subr.mxu0 0.0
    %125 = vmatpush2.msra.mxu0 0.0
    %126 = vmatprep.subr.mxu0 0.0
    %127 = vmatpush2.msra.mxu0 0.0
    %128 = vmatprep.subr.mxu0 0.0
    %129 = vmatpush2.msra.mxu0 0.0
    %130 = vmatprep.subr.mxu0 0.0
    %131 = vmatpush2.msra.mxu0 0.0
    %132 = vmatprep.subr.mxu0 0.0
    %133 = vmatpush2.msra.mxu0 0.0
    %134 = vmatprep.subr.mxu0 0.0
    %135 = vmatpush2.msra.mxu0 0.0
    %136 = vmatprep.subr.mxu0 0.0
    %137 = vmatpush2.msra.mxu0 0.0
    %138 = vmatprep.mubr.f32.mxu0 0.0
    %139 = vmatmul.mubr.f32.gmra.mxu0 %v72
    %v140 = vpop.f32.mrf.mxu0
    %v141 = vadd.f32 0.0, %v140
    %v142 = vpop.f32.mrf.mxu0
    %143 = vdwg.mxu0
    %v144 = vld [vmem:[#allocation6] sm:$0xff]
    %v145 = vld [vmem:[#allocation6 + $0x8] sm:$0xff]
    %v146 = vld [vmem:[#allocation6 + $0x10] sm:$0xff]
    %v147 = vld [vmem:[#allocation6 + $0x18] sm:$0xff]
    %v148 = vld [vmem:[#allocation6 + $0x20] sm:$0xff]
    %v149 = vld [vmem:[#allocation6 + $0x28] sm:$0xff]
    %v150 = vld [vmem:[#allocation6 + $0x30] sm:$0xff]
    %v151 = vld [vmem:[#allocation6 + $0x38] sm:$0xff]
    %152 = vset.pattern.permute.xlu0 1
    %153 = vperm.xlu0 %152, %v55
    %v154 = vpop.permute.xlu0 %153
    %vm155 = vcmp.eq.s32.totalorder %v154, %v54
    %v156 = vsel %vm155, 1, 0
    %v157 = vcvt.s32.f32 %v156
    %v159 = vsel %vm70, %v157, 0
    %161 = vmatprep.subr.mxu0 0.0
    %162 = vmatpush1.msra.mxu0 0.0
    %163 = vmatprep.subr.mxu0 0.0
    %164 = vmatpush1.msra.mxu0 0.0
    %165 = vmatprep.subr.mxu0 0.0
    %166 = vmatpush1.msra.mxu0 0.0
    %167 = vmatprep.subr.mxu0 0.0
    %168 = vmatpush1.msra.mxu0 0.0
    %169 = vmatprep.subr.mxu0 0.0
    %170 = vmatpush1.msra.mxu0 0.0
    %171 = vmatprep.subr.mxu0 0.0
    %172 = vmatpush1.msra.mxu0 0.0
    %173 = vmatprep.subr.mxu0 0.0
    %174 = vmatpush1.msra.mxu0 0.0
    %175 = vmatprep.subr.mxu0 0.0
    %176 = vmatpush1.msra.mxu0 0.0
    %177 = vmatprep.subr.mxu0 0.0
    %178 = vmatpush1.msra.mxu0 %v151
    %179 = vmatprep.subr.mxu0 0.0
    %180 = vmatpush1.msra.mxu0 %v150
    %181 = vmatprep.subr.mxu0 0.0
    %182 = vmatpush1.msra.mxu0 %v149
    %183 = vmatprep.subr.mxu0 0.0
    %184 = vmatpush1.msra.mxu0 %v148
    %185 = vmatprep.subr.mxu0 0.0
    %186 = vmatpush1.msra.mxu0 %v147
    %187 = vmatprep.subr.mxu0 0.0
    %188 = vmatpush1.msra.mxu0 %v146
    %189 = vmatprep.subr.mxu0 0.0
    %190 = vmatpush1.msra.mxu0 %v145
    %191 = vmatprep.subr.mxu0 0.0
    %192 = vmatpush1.msra.mxu0 %v144
    %193 = vmatprep.subr.mxu0 0.0
    %194 = vmatpush2.msra.mxu0 0.0
    %195 = vmatprep.subr.mxu0 0.0
    %196 = vmatpush2.msra.mxu0 0.0
    %197 = vmatprep.subr.mxu0 0.0
    %198 = vmatpush2.msra.mxu0 0.0
    %199 = vmatprep.subr.mxu0 0.0
    %200 = vmatpush2.msra.mxu0 0.0
    %201 = vmatprep.subr.mxu0 0.0
    %202 = vmatpush2.msra.mxu0 0.0
    %203 = vmatprep.subr.mxu0 0.0
    %204 = vmatpush2.msra.mxu0 0.0
    %205 = vmatprep.subr.mxu0 0.0
    %206 = vmatpush2.msra.mxu0 0.0
    %207 = vmatprep.subr.mxu0 0.0
    %208 = vmatpush2.msra.mxu0 0.0
    %209 = vmatprep.subr.mxu0 0.0
    %210 = vmatpush2.msra.mxu0 0.0
    %211 = vmatprep.subr.mxu0 0.0
    %212 = vmatpush2.msra.mxu0 0.0
    %213 = vmatprep.subr.mxu0 0.0
    %214 = vmatpush2.msra.mxu0 0.0
    %215 = vmatprep.subr.mxu0 0.0
    %216 = vmatpush2.msra.mxu0 0.0
    %217 = vmatprep.subr.mxu0 0.0
    %218 = vmatpush2.msra.mxu0 0.0
    %219 = vmatprep.subr.mxu0 0.0
    %220 = vmatpush2.msra.mxu0 0.0
    %221 = vmatprep.subr.mxu0 0.0
    %222 = vmatpush2.msra.mxu0 0.0
    %223 = vmatprep.subr.mxu0 0.0
    %224 = vmatpush2.msra.mxu0 0.0
    %225 = vmatprep.mubr.f32.mxu0 0.0
    %226 = vmatmul.mubr.f32.gmra.mxu0 %v159
    %v227 = vpop.f32.mrf.mxu0
    %v228 = vadd.f32 0.0, %v227
    %v229 = vpop.f32.mrf.mxu0
    %230 = vdwg.mxu0
    %v231 = vmul.f32 %v228, %v141
    %vm232 = vcmask 1041408
    %v233 = vsel %vm232, %v231, 0.0
    %234 = vadd.xlane.f32.xlu0 %v233
    %v235 = vpop.xlane.xlu0 %234
    %236 = vset.pattern.permute.xlu0 2
    %237 = vperm.xlu0 %236, %v55
    %v238 = vpop.permute.xlu0 %237
    %vm239 = vcmp.eq.s32.totalorder %v238, %v54
    %v240 = vsel %vm239, 1, 0
    %v241 = vcvt.s32.f32 %v240
    %v243 = vsel %vm70, %v241, 0
    %245 = vmatprep.subr.mxu0 0.0
    %246 = vmatpush1.msra.mxu0 0.0
    %247 = vmatprep.subr.mxu0 0.0
    %248 = vmatpush1.msra.mxu0 0.0
    %249 = vmatprep.subr.mxu0 0.0
    %250 = vmatpush1.msra.mxu0 0.0
    %251 = vmatprep.subr.mxu0 0.0
    %252 = vmatpush1.msra.mxu0 0.0
    %253 = vmatprep.subr.mxu0 0.0
    %254 = vmatpush1.msra.mxu0 0.0
    %255 = vmatprep.subr.mxu0 0.0
    %256 = vmatpush1.msra.mxu0 0.0
    %257 = vmatprep.subr.mxu0 0.0
    %258 = vmatpush1.msra.mxu0 0.0
    %259 = vmatprep.subr.mxu0 0.0
    %260 = vmatpush1.msra.mxu0 0.0
    %261 = vmatprep.subr.mxu0 0.0
    %262 = vmatpush1.msra.mxu0 %v151
    %263 = vmatprep.subr.mxu0 0.0
    %264 = vmatpush1.msra.mxu0 %v150
    %265 = vmatprep.subr.mxu0 0.0
    %266 = vmatpush1.msra.mxu0 %v149
    %267 = vmatprep.subr.mxu0 0.0
    %268 = vmatpush1.msra.mxu0 %v148
    %269 = vmatprep.subr.mxu0 0.0
    %270 = vmatpush1.msra.mxu0 %v147
    %271 = vmatprep.subr.mxu0 0.0
    %272 = vmatpush1.msra.mxu0 %v146
    %273 = vmatprep.subr.mxu0 0.0
    %274 = vmatpush1.msra.mxu0 %v145
    %275 = vmatprep.subr.mxu0 0.0
    %276 = vmatpush1.msra.mxu0 %v144
    %277 = vmatprep.subr.mxu0 0.0
    %278 = vmatpush2.msra.mxu0 0.0
    %279 = vmatprep.subr.mxu0 0.0
    %280 = vmatpush2.msra.mxu0 0.0
    %281 = vmatprep.subr.mxu0 0.0
    %282 = vmatpush2.msra.mxu0 0.0
    %283 = vmatprep.subr.mxu0 0.0
    %284 = vmatpush2.msra.mxu0 0.0
    %285 = vmatprep.subr.mxu0 0.0
    %286 = vmatpush2.msra.mxu0 0.0
    %287 = vmatprep.subr.mxu0 0.0
    %288 = vmatpush2.msra.mxu0 0.0
    %289 = vmatprep.subr.mxu0 0.0
    %290 = vmatpush2.msra.mxu0 0.0
    %291 = vmatprep.subr.mxu0 0.0
    %292 = vmatpush2.msra.mxu0 0.0
    %293 = vmatprep.subr.mxu0 0.0
    %294 = vmatpush2.msra.mxu0 0.0
    %295 = vmatprep.subr.mxu0 0.0
    %296 = vmatpush2.msra.mxu0 0.0
    %297 = vmatprep.subr.mxu0 0.0
    %298 = vmatpush2.msra.mxu0 0.0
    %299 = vmatprep.subr.mxu0 0.0
    %300 = vmatpush2.msra.mxu0 0.0
    %301 = vmatprep.subr.mxu0 0.0
    %302 = vmatpush2.msra.mxu0 0.0
    %303 = vmatprep.subr.mxu0 0.0
    %304 = vmatpush2.msra.mxu0 0.0
    %305 = vmatprep.subr.mxu0 0.0
    %306 = vmatpush2.msra.mxu0 0.0
    %307 = vmatprep.subr.mxu0 0.0
    %308 = vmatpush2.msra.mxu0 0.0
    %309 = vmatprep.mubr.f32.mxu0 0.0
    %310 = vmatmul.mubr.f32.gmra.mxu0 %v243
    %v311 = vpop.f32.mrf.mxu0
    %v312 = vadd.f32 0.0, %v311
    %v313 = vpop.f32.mrf.mxu0
    %314 = vdwg.mxu0
    %v315 = vmul.f32 %v312, %v141
    %v316 = vsel %vm232, %v315, 0.0
    %317 = vadd.xlane.f32.xlu0 %v316
    %v318 = vpop.xlane.xlu0 %317
    %319 = vset.pattern.permute.xlu0 3
    %320 = vperm.xlu0 %319, %v55
    %v321 = vpop.permute.xlu0 %320
    %vm322 = vcmp.eq.s32.totalorder %v321, %v54
    %v323 = vsel %vm322, 1, 0
    %v324 = vcvt.s32.f32 %v323
    %v326 = vsel %vm70, %v324, 0
    %328 = vmatprep.subr.mxu0 0.0
    %329 = vmatpush1.msra.mxu0 0.0
    %330 = vmatprep.subr.mxu0 0.0
    %331 = vmatpush1.msra.mxu0 0.0
    %332 = vmatprep.subr.mxu0 0.0
    %333 = vmatpush1.msra.mxu0 0.0
    %334 = vmatprep.subr.mxu0 0.0
    %335 = vmatpush1.msra.mxu0 0.0
    %336 = vmatprep.subr.mxu0 0.0
    %337 = vmatpush1.msra.mxu0 0.0
    %338 = vmatprep.subr.mxu0 0.0
    %339 = vmatpush1.msra.mxu0 0.0
    %340 = vmatprep.subr.mxu0 0.0
    %341 = vmatpush1.msra.mxu0 0.0
    %342 = vmatprep.subr.mxu0 0.0
    %343 = vmatpush1.msra.mxu0 0.0
    %344 = vmatprep.subr.mxu0 0.0
    %345 = vmatpush1.msra.mxu0 %v151
    %346 = vmatprep.subr.mxu0 0.0
    %347 = vmatpush1.msra.mxu0 %v150
    %348 = vmatprep.subr.mxu0 0.0
    %349 = vmatpush1.msra.mxu0 %v149
    %350 = vmatprep.subr.mxu0 0.0
    %351 = vmatpush1.msra.mxu0 %v148
    %352 = vmatprep.subr.mxu0 0.0
    %353 = vmatpush1.msra.mxu0 %v147
    %354 = vmatprep.subr.mxu0 0.0
    %355 = vmatpush1.msra.mxu0 %v146
    %356 = vmatprep.subr.mxu0 0.0
    %357 = vmatpush1.msra.mxu0 %v145
    %358 = vmatprep.subr.mxu0 0.0
    %359 = vmatpush1.msra.mxu0 %v144
    %360 = vmatprep.subr.mxu0 0.0
    %361 = vmatpush2.msra.mxu0 0.0
    %362 = vmatprep.subr.mxu0 0.0
    %363 = vmatpush2.msra.mxu0 0.0
    %364 = vmatprep.subr.mxu0 0.0
    %365 = vmatpush2.msra.mxu0 0.0
    %366 = vmatprep.subr.mxu0 0.0
    %367 = vmatpush2.msra.mxu0 0.0
    %368 = vmatprep.subr.mxu0 0.0
    %369 = vmatpush2.msra.mxu0 0.0
    %370 = vmatprep.subr.mxu0 0.0
    %371 = vmatpush2.msra.mxu0 0.0
    %372 = vmatprep.subr.mxu0 0.0
    %373 = vmatpush2.msra.mxu0 0.0
    %374 = vmatprep.subr.mxu0 0.0
    %375 = vmatpush2.msra.mxu0 0.0
    %376 = vmatprep.subr.mxu0 0.0
    %377 = vmatpush2.msra.mxu0 0.0
    %378 = vmatprep.subr.mxu0 0.0
    %379 = vmatpush2.msra.mxu0 0.0
    %380 = vmatprep.subr.mxu0 0.0
    %381 = vmatpush2.msra.mxu0 0.0
    %382 = vmatprep.subr.mxu0 0.0
    %383 = vmatpush2.msra.mxu0 0.0
    %384 = vmatprep.subr.mxu0 0.0
    %385 = vmatpush2.msra.mxu0 0.0
    %386 = vmatprep.subr.mxu0 0.0
    %387 = vmatpush2.msra.mxu0 0.0
    %388 = vmatprep.subr.mxu0 0.0
    %389 = vmatpush2.msra.mxu0 0.0
    %390 = vmatprep.subr.mxu0 0.0
    %391 = vmatpush2.msra.mxu0 0.0
    %392 = vmatprep.mubr.f32.mxu0 0.0
    %393 = vmatmul.mubr.f32.gmra.mxu0 %v326
    %v394 = vpop.f32.mrf.mxu0
    %v395 = vadd.f32 0.0, %v394
    %v396 = vpop.f32.mrf.mxu0
    %397 = vdwg.mxu0
    %v398 = vmul.f32 %v395, %v141
    %v399 = vsel %vm232, %v398, 0.0
    %400 = vadd.xlane.f32.xlu0 %v399
    %v401 = vpop.xlane.xlu0 %400
    %402 = vset.pattern.permute.xlu0 4
    %403 = vperm.xlu0 %402, %v55
    %v404 = vpop.permute.xlu0 %403
    %vm405 = vcmp.eq.s32.totalorder %v404, %v54
    %v406 = vsel %vm405, 1, 0
    %v407 = vcvt.s32.f32 %v406
    %v409 = vsel %vm70, %v407, 0
    %411 = vmatprep.subr.mxu0 0.0
    %412 = vmatpush1.msra.mxu0 0.0
    %413 = vmatprep.subr.mxu0 0.0
    %414 = vmatpush1.msra.mxu0 0.0
    %415 = vmatprep.subr.mxu0 0.0
    %416 = vmatpush1.msra.mxu0 0.0
    %417 = vmatprep.subr.mxu0 0.0
    %418 = vmatpush1.msra.mxu0 0.0
    %419 = vmatprep.subr.mxu0 0.0
    %420 = vmatpush1.msra.mxu0 0.0
    %421 = vmatprep.subr.mxu0 0.0
    %422 = vmatpush1.msra.mxu0 0.0
    %423 = vmatprep.subr.mxu0 0.0
    %424 = vmatpush1.msra.mxu0 0.0
    %425 = vmatprep.subr.mxu0 0.0
    %426 = vmatpush1.msra.mxu0 0.0
    %427 = vmatprep.subr.mxu0 0.0
    %428 = vmatpush1.msra.mxu0 %v151
    %429 = vmatprep.subr.mxu0 0.0
    %430 = vmatpush1.msra.mxu0 %v150
    %431 = vmatprep.subr.mxu0 0.0
    %432 = vmatpush1.msra.mxu0 %v149
    %433 = vmatprep.subr.mxu0 0.0
    %434 = vmatpush1.msra.mxu0 %v148
    %435 = vmatprep.subr.mxu0 0.0
    %436 = vmatpush1.msra.mxu0 %v147
    %437 = vmatprep.subr.mxu0 0.0
    %438 = vmatpush1.msra.mxu0 %v146
    %439 = vmatprep.subr.mxu0 0.0
    %440 = vmatpush1.msra.mxu0 %v145
    %441 = vmatprep.subr.mxu0 0.0
    %442 = vmatpush1.msra.mxu0 %v144
    %443 = vmatprep.subr.mxu0 0.0
    %444 = vmatpush2.msra.mxu0 0.0
    %445 = vmatprep.subr.mxu0 0.0
    %446 = vmatpush2.msra.mxu0 0.0
    %447 = vmatprep.subr.mxu0 0.0
    %448 = vmatpush2.msra.mxu0 0.0
    %449 = vmatprep.subr.mxu0 0.0
    %450 = vmatpush2.msra.mxu0 0.0
    %451 = vmatprep.subr.mxu0 0.0
    %452 = vmatpush2.msra.mxu0 0.0
    %453 = vmatprep.subr.mxu0 0.0
    %454 = vmatpush2.msra.mxu0 0.0
    %455 = vmatprep.subr.mxu0 0.0
    %456 = vmatpush2.msra.mxu0 0.0
    %457 = vmatprep.subr.mxu0 0.0
    %458 = vmatpush2.msra.mxu0 0.0
    %459 = vmatprep.subr.mxu0 0.0
    %460 = vmatpush2.msra.mxu0 0.0
    %461 = vmatprep.subr.mxu0 0.0
    %462 = vmatpush2.msra.mxu0 0.0
    %463 = vmatprep.subr.mxu0 0.0
    %464 = vmatpush2.msra.mxu0 0.0
    %465 = vmatprep.subr.mxu0 0.0
    %466 = vmatpush2.msra.mxu0 0.0
    %467 = vmatprep.subr.mxu0 0.0
    %468 = vmatpush2.msra.mxu0 0.0
    %469 = vmatprep.subr.mxu0 0.0
    %470 = vmatpush2.msra.mxu0 0.0
    %471 = vmatprep.subr.mxu0 0.0
    %472 = vmatpush2.msra.mxu0 0.0
    %473 = vmatprep.subr.mxu0 0.0
    %474 = vmatpush2.msra.mxu0 0.0
    %475 = vmatprep.mubr.f32.mxu0 0.0
    %476 = vmatmul.mubr.f32.gmra.mxu0 %v409
    %v477 = vpop.f32.mrf.mxu0
    %v478 = vadd.f32 0.0, %v477
    %v479 = vpop.f32.mrf.mxu0
    %480 = vdwg.mxu0
    %v481 = vmul.f32 %v478, %v141
    %v482 = vsel %vm232, %v481, 0.0
    %483 = vadd.xlane.f32.xlu0 %v482
    %v484 = vpop.xlane.xlu0 %483
    %485 = vset.pattern.permute.xlu0 5
    %486 = vperm.xlu0 %485, %v55
    %v487 = vpop.permute.xlu0 %486
    %vm488 = vcmp.eq.s32.totalorder %v487, %v54
    %v489 = vsel %vm488, 1, 0
    %v490 = vcvt.s32.f32 %v489
    %v492 = vsel %vm70, %v490, 0
    %494 = vmatprep.subr.mxu0 0.0
    %495 = vmatpush1.msra.mxu0 0.0
    %496 = vmatprep.subr.mxu0 0.0
    %497 = vmatpush1.msra.mxu0 0.0
    %498 = vmatprep.subr.mxu0 0.0
    %499 = vmatpush1.msra.mxu0 0.0
    %500 = vmatprep.subr.mxu0 0.0
    %501 = vmatpush1.msra.mxu0 0.0
    %502 = vmatprep.subr.mxu0 0.0
    %503 = vmatpush1.msra.mxu0 0.0
    %504 = vmatprep.subr.mxu0 0.0
    %505 = vmatpush1.msra.mxu0 0.0
    %506 = vmatprep.subr.mxu0 0.0
    %507 = vmatpush1.msra.mxu0 0.0
    %508 = vmatprep.subr.mxu0 0.0
    %509 = vmatpush1.msra.mxu0 0.0
    %510 = vmatprep.subr.mxu0 0.0
    %511 = vmatpush1.msra.mxu0 %v151
    %512 = vmatprep.subr.mxu0 0.0
    %513 = vmatpush1.msra.mxu0 %v150
    %514 = vmatprep.subr.mxu0 0.0
    %515 = vmatpush1.msra.mxu0 %v149
    %516 = vmatprep.subr.mxu0 0.0
    %517 = vmatpush1.msra.mxu0 %v148
    %518 = vmatprep.subr.mxu0 0.0
    %519 = vmatpush1.msra.mxu0 %v147
    %520 = vmatprep.subr.mxu0 0.0
    %521 = vmatpush1.msra.mxu0 %v146
    %522 = vmatprep.subr.mxu0 0.0
    %523 = vmatpush1.msra.mxu0 %v145
    %524 = vmatprep.subr.mxu0 0.0
    %525 = vmatpush1.msra.mxu0 %v144
    %526 = vmatprep.subr.mxu0 0.0
    %527 = vmatpush2.msra.mxu0 0.0
    %528 = vmatprep.subr.mxu0 0.0
    %529 = vmatpush2.msra.mxu0 0.0
    %530 = vmatprep.subr.mxu0 0.0
    %531 = vmatpush2.msra.mxu0 0.0
    %532 = vmatprep.subr.mxu0 0.0
    %533 = vmatpush2.msra.mxu0 0.0
    %534 = vmatprep.subr.mxu0 0.0
    %535 = vmatpush2.msra.mxu0 0.0
    %536 = vmatprep.subr.mxu0 0.0
    %537 = vmatpush2.msra.mxu0 0.0
    %538 = vmatprep.subr.mxu0 0.0
    %539 = vmatpush2.msra.mxu0 0.0
    %540 = vmatprep.subr.mxu0 0.0
    %541 = vmatpush2.msra.mxu0 0.0
    %542 = vmatprep.subr.mxu0 0.0
    %543 = vmatpush2.msra.mxu0 0.0
    %544 = vmatprep.subr.mxu0 0.0
    %545 = vmatpush2.msra.mxu0 0.0
    %546 = vmatprep.subr.mxu0 0.0
    %547 = vmatpush2.msra.mxu0 0.0
    %548 = vmatprep.subr.mxu0 0.0
    %549 = vmatpush2.msra.mxu0 0.0
    %550 = vmatprep.subr.mxu0 0.0
    %551 = vmatpush2.msra.mxu0 0.0
    %552 = vmatprep.subr.mxu0 0.0
    %553 = vmatpush2.msra.mxu0 0.0
    %554 = vmatprep.subr.mxu0 0.0
    %555 = vmatpush2.msra.mxu0 0.0
    %556 = vmatprep.subr.mxu0 0.0
    %557 = vmatpush2.msra.mxu0 0.0
    %558 = vmatprep.mubr.f32.mxu0 0.0
    %559 = vmatmul.mubr.f32.gmra.mxu0 %v492
    %v560 = vpop.f32.mrf.mxu0
    %v561 = vadd.f32 0.0, %v560
    %v562 = vpop.f32.mrf.mxu0
    %563 = vdwg.mxu0
    %v564 = vmul.f32 %v561, %v141
    %v565 = vsel %vm232, %v564, 0.0
    %566 = vadd.xlane.f32.xlu0 %v565
    %v567 = vpop.xlane.xlu0 %566
    %568 = vset.pattern.permute.xlu0 6
    %569 = vperm.xlu0 %568, %v55
    %v570 = vpop.permute.xlu0 %569
    %vm571 = vcmp.eq.s32.totalorder %v570, %v54
    %v572 = vsel %vm571, 1, 0
    %v573 = vcvt.s32.f32 %v572
    %v575 = vsel %vm70, %v573, 0
    %577 = vmatprep.subr.mxu0 0.0
    %578 = vmatpush1.msra.mxu0 0.0
    %579 = vmatprep.subr.mxu0 0.0
    %580 = vmatpush1.msra.mxu0 0.0
    %581 = vmatprep.subr.mxu0 0.0
    %582 = vmatpush1.msra.mxu0 0.0
    %583 = vmatprep.subr.mxu0 0.0
    %584 = vmatpush1.msra.mxu0 0.0
    %585 = vmatprep.subr.mxu0 0.0
    %586 = vmatpush1.msra.mxu0 0.0
    %587 = vmatprep.subr.mxu0 0.0
    %588 = vmatpush1.msra.mxu0 0.0
    %589 = vmatprep.subr.mxu0 0.0
    %590 = vmatpush1.msra.mxu0 0.0
    %591 = vmatprep.subr.mxu0 0.0
    %592 = vmatpush1.msra.mxu0 0.0
    %593 = vmatprep.subr.mxu0 0.0
    %594 = vmatpush1.msra.mxu0 %v151
    %595 = vmatprep.subr.mxu0 0.0
    %596 = vmatpush1.msra.mxu0 %v150
    %597 = vmatprep.subr.mxu0 0.0
    %598 = vmatpush1.msra.mxu0 %v149
    %599 = vmatprep.subr.mxu0 0.0
    %600 = vmatpush1.msra.mxu0 %v148
    %601 = vmatprep.subr.mxu0 0.0
    %602 = vmatpush1.msra.mxu0 %v147
    %603 = vmatprep.subr.mxu0 0.0
    %604 = vmatpush1.msra.mxu0 %v146
    %605 = vmatprep.subr.mxu0 0.0
    %606 = vmatpush1.msra.mxu0 %v145
    %607 = vmatprep.subr.mxu0 0.0
    %608 = vmatpush1.msra.mxu0 %v144
    %609 = vmatprep.subr.mxu0 0.0
    %610 = vmatpush2.msra.mxu0 0.0
    %611 = vmatprep.subr.mxu0 0.0
    %612 = vmatpush2.msra.mxu0 0.0
    %613 = vmatprep.subr.mxu0 0.0
    %614 = vmatpush2.msra.mxu0 0.0
    %615 = vmatprep.subr.mxu0 0.0
    %616 = vmatpush2.msra.mxu0 0.0
    %617 = vmatprep.subr.mxu0 0.0
    %618 = vmatpush2.msra.mxu0 0.0
    %619 = vmatprep.subr.mxu0 0.0
    %620 = vmatpush2.msra.mxu0 0.0
    %621 = vmatprep.subr.mxu0 0.0
    %622 = vmatpush2.msra.mxu0 0.0
    %623 = vmatprep.subr.mxu0 0.0
    %624 = vmatpush2.msra.mxu0 0.0
    %625 = vmatprep.subr.mxu0 0.0
    %626 = vmatpush2.msra.mxu0 0.0
    %627 = vmatprep.subr.mxu0 0.0
    %628 = vmatpush2.msra.mxu0 0.0
    %629 = vmatprep.subr.mxu0 0.0
    %630 = vmatpush2.msra.mxu0 0.0
    %631 = vmatprep.subr.mxu0 0.0
    %632 = vmatpush2.msra.mxu0 0.0
    %633 = vmatprep.subr.mxu0 0.0
    %634 = vmatpush2.msra.mxu0 0.0
    %635 = vmatprep.subr.mxu0 0.0
    %636 = vmatpush2.msra.mxu0 0.0
    %637 = vmatprep.subr.mxu0 0.0
    %638 = vmatpush2.msra.mxu0 0.0
    %639 = vmatprep.subr.mxu0 0.0
    %640 = vmatpush2.msra.mxu0 0.0
    %641 = vmatprep.mubr.f32.mxu0 0.0
    %642 = vmatmul.mubr.f32.gmra.mxu0 %v575
    %v643 = vpop.f32.mrf.mxu0
    %v644 = vadd.f32 0.0, %v643
    %v645 = vpop.f32.mrf.mxu0
    %646 = vdwg.mxu0
    %v647 = vmul.f32 %v644, %v141
    %v648 = vsel %vm232, %v647, 0.0
    %649 = vadd.xlane.f32.xlu0 %v648
    %v650 = vpop.xlane.xlu0 %649
    %vm651 = vcmask 7168
    %v652 = vsel %vm651, %v235, %v318
    %vm653 = vcmask 15360
    %v654 = vsel %vm653, %v652, %v401
    %vm655 = vcmask 23552
    %v656 = vsel %vm655, %v654, %v484
    %vm657 = vcmask 31744
    %v658 = vsel %vm657, %v656, %v567
    %vm659 = vcmask 39936
    %v660 = vsel %vm659, %v658, %v650
    %661 = vxpose.xlu0.b32.start [1/16] %v660, 128
    %662 = vxpose.xlu0.b32.cont [2/16] 0.0, 128
    %663 = vxpose.xlu0.b32.cont [3/16] 0.0, 128
    %664 = vxpose.xlu0.b32.cont [4/16] 0.0, 128
    %665 = vxpose.xlu0.b32.cont [5/16] 0.0, 128
    %666 = vxpose.xlu0.b32.cont [6/16] 0.0, 128
    %667 = vxpose.xlu0.b32.cont [7/16] 0.0, 128
    %668 = vxpose.xlu0.b32.cont [8/16] 0.0, 128
    %669 = vxpose.xlu0.b32.cont [9/16] 0.0, 128
    %670 = vxpose.xlu0.b32.cont [10/16] 0.0, 128
    %671 = vxpose.xlu0.b32.cont [11/16] 0.0, 128
    %672 = vxpose.xlu0.b32.cont [12/16] 0.0, 128
    %673 = vxpose.xlu0.b32.cont [13/16] 0.0, 128
    %674 = vxpose.xlu0.b32.cont [14/16] 0.0, 128
    %675 = vxpose.xlu0.b32.cont [15/16] 0.0, 128
    %676 = vxpose.xlu0.b32.end [16/16] 0.0, 128
    %v677 = vpop.trf.xlu0
    %v678 = vpop.trf.xlu0
    %v679 = vpop.trf.xlu0
    %v680 = vpop.trf.xlu0
    %v681 = vpop.trf.xlu0
    %v682 = vpop.trf.xlu0
    %v683 = vpop.trf.xlu0
    %v684 = vpop.trf.xlu0
    %v685 = vpop.trf.xlu0
    %v686 = vpop.trf.xlu0
    %v687 = vpop.trf.xlu0
    %v688 = vpop.trf.xlu0
    %v689 = vpop.trf.xlu0
    %v690 = vpop.trf.xlu0
    %v691 = vpop.trf.xlu0
    %v692 = vpop.trf.xlu0
    %vm693 = vcmask 13312
    %694 = vst.msk [vmem:[%s3] sm:$0x3f] %vm693, %v677
    // Predicated region
    $region26: #{tpu_custom_call.1} parent=1 // pred_check
      _
    $region27: #{tpu_custom_call.1} parent=1 // pred_check_branch
      %696 = sbr.rel (0) target = $region29
    $region28: #{tpu_custom_call.1} parent=1 // pred_region
      _
    $region29: #{tpu_custom_call.1} parent=1 // pred_fallthru
      _
    // Predicated region
    $region30: #{tpu_custom_call.1} parent=1 // pred_check
      _
    $region31: #{tpu_custom_call.1} parent=1 // pred_check_branch
      %698 = sbr.rel (0) target = $region33
    $region32: #{tpu_custom_call.1} parent=1 // pred_region
      _
    $region33: #{tpu_custom_call.1} parent=1 // pred_fallthru
      _
    %699 = vsyncpa [#allocation3], 1
    %700 = vsyncpa [#allocation5], 1

</llo_original>
